<compile_context>
chip_gen: v7x
topology: tpu7x:2x2x1
jax: 0.10.0
libtpu: 0.0.40
codegen_flags: <defaults>
</compile_context>

<pallas_src>
import math

import jax
import jax.numpy as jnp
from jax import lax
from jax.experimental import pallas as pl
from jax.experimental.pallas import tpu as pltpu


_INV_SQRT2 = 0.7071067811865475  # 1/sqrt(2)


# ---------------------------------------------------------------------------
# Kernels
# ---------------------------------------------------------------------------

def _make_mlp_kernel(tiled, approximate_gelu):
    """Builds the kernel body.

    tiled=False : grid = (row_tiles,)       -> fc1+gelu+fc2, write output directly.
    tiled=True  : grid = (row_tiles, mtiles) -> f32 accumulator over mlp tiles.
    """

    def _gelu(h):
        if approximate_gelu:
            # tanh form -> EUP slot (otherwise idle), frees the VALU slot.
            return jax.nn.gelu(h, approximate=True)
        # exact GELU: 0.5 * x * (1 + erf(x / sqrt(2)))  (torch.nn.functional.gelu default)
        return 0.5 * h * (1.0 + lax.erf(h * _INV_SQRT2))

    if not tiled:
        def kernel(x_ref, w1_ref, b1_ref, w2_ref, b2_ref, o_ref):
            # fc1: (TM, Hp) @ (Hp, Mp) on the MXU, f32 accumulation.
            h = jnp.dot(x_ref[...], w1_ref[...], preferred_element_type=jnp.float32)
            h = _gelu(h + b1_ref[...])
            # dropout (eval mode) == identity
            out = jnp.dot(h.astype(w2_ref.dtype), w2_ref[...],
                          preferred_element_type=jnp.float32)
            o_ref[...] = (out + b2_ref[...]).astype(o_ref.dtype)
        return kernel

    def kernel(x_ref, w1_ref, b1_ref, w2_ref, b2_ref, o_ref, acc_ref):
        j = pl.program_id(1)

        @pl.when(j == 0)
        def _init():
            acc_ref[...] = jnp.zeros_like(acc_ref)

        h = jnp.dot(x_ref[...], w1_ref[...], preferred_element_type=jnp.float32)
        h = _gelu(h + b1_ref[...])
        # dropout (eval mode) == identity
        acc_ref[...] += jnp.dot(h.astype(w2_ref.dtype), w2_ref[...],
                                preferred_element_type=jnp.float32)

        @pl.when(j == pl.num_programs(1) - 1)
        def _finalize():
            o_ref[...] = (acc_ref[...] + b2_ref[...]).astype(o_ref.dtype)

    return kernel


# ---------------------------------------------------------------------------
# Sizing helpers
# ---------------------------------------------------------------------------

def _round_up(x, m):
    return ((x + m - 1) // m) * m


def _vmem_capacity_bytes():
    """Per-core VMEM capacity; conservative 64 MiB (v7x per-TC) if unavailable."""
    try:
        info = pltpu.get_tpu_info()
        cap = getattr(info, "vmem_capacity_bytes", None)
        if cap:
            return int(cap)
    except Exception:
        pass
    return 64 * 1024 * 1024


def _choose_mlp_tile(hidden_p, mlp_dim, itemsize, resident_budget, tiled_budget):
    """Pick (mlp_tile, padded_mlp_dim).

    Prefers full residency (single mlp tile, single-buffered weights).  Otherwise
    picks a tile that is a multiple of 256 (MXU-friendly K for fc2) and pads
    mlp_dim up to tile * n_tiles; no silent over-budget fallback.
    """
    w_bytes = 2 * hidden_p * mlp_dim * itemsize        # W1 + W2 (single copy)
    if w_bytes <= resident_budget:
        return mlp_dim, mlp_dim

    # Tiled: the W1/W2 slices are double buffered -> 2 * (2*H*mt*itemsize) each step.
    mt_max = tiled_budget // (4 * hidden_p * itemsize)
    mt_max = max(256, (mt_max // 256) * 256)
    n_tiles = max(1, -(-mlp_dim // mt_max))
    mt = _round_up(-(-mlp_dim // n_tiles), 256)
    m_pad = mt * n_tiles
    return mt, m_pad


# ---------------------------------------------------------------------------
# Wrapper
# ---------------------------------------------------------------------------

def mlp_pallas(x, w1, b1, w2, b2, *, row_tile=None, approximate_gelu=False,
               prefer_bf16_matmul=False):
    """TransUNet Mlp forward: gelu(x @ w1 + b1) @ w2 + b2  (dropout = eval identity).

    x : (B, S, H).  w1: (H, M), w2: (M, H)  (pre-transposed vs nn.Linear storage).
    b1: (M,) / (1, M), b2: (H,) / (1, H)  (kept in f32).
    Works with f32 or bf16 x / weights; matmuls always accumulate in f32.
    """
    B, S, H = x.shape
    M = w1.shape[1]
    N = B * S
    out_dtype = x.dtype

    if prefer_bf16_matmul:
        # MXU-native operands; halves weight DMA & VMEM (see perf note). Numerics
        # deviate slightly more from the f32 torch reference than f32 storage.
        x = x.astype(jnp.bfloat16)
        w1 = w1.astype(jnp.bfloat16)
        w2 = w2.astype(jnp.bfloat16)

    b1 = jnp.asarray(b1, jnp.float32).reshape(1, -1)
    b2 = jnp.asarray(b2, jnp.float32).reshape(1, -1)

    x2d = x.reshape(N, H)

    # --- pad hidden to a lane-dense multiple of 128 (zeros => exact result) ---
    Hp = _round_up(H, 128)
    if Hp != H:
        x2d = jnp.pad(x2d, ((0, 0), (0, Hp - H)))
        w1 = jnp.pad(w1, ((0, Hp - H), (0, 0)))
        w2 = jnp.pad(w2, ((0, 0), (0, Hp - H)))
        b2 = jnp.pad(b2, ((0, 0), (0, Hp - H)))

    # --- generation-aware VMEM budgets ---
    vmem_cap = _vmem_capacity_bytes()
    vmem_limit = min(int(vmem_cap * 0.70), 100 * 1024 * 1024)
    resident_budget = int(vmem_cap * 0.45)   # single-buffered W1+W2 must fit here
    tiled_budget = int(vmem_cap * 0.25)      # double-buffered weight slices

    itemsize = jnp.dtype(w1.dtype).itemsize
    mt, m_pad = _choose_mlp_tile(Hp, M, itemsize, resident_budget, tiled_budget)
    if m_pad != M:
        # zero-padded fc1 outputs: gelu(0)=0 and the matching fc2 rows are zero.
        w1 = jnp.pad(w1, ((0, 0), (0, m_pad - M)))
        b1 = jnp.pad(b1, ((0, 0), (0, m_pad - M)))
        w2 = jnp.pad(w2, ((0, m_pad - M), (0, 0)))
    m_tiles = m_pad // mt

    # --- row tile: big when weights must be re-streamed; >=2 tiles for megacore ---
    if row_tile is None:
        row_tile = 512 if m_tiles > 1 else 256
    tm = min(int(row_tile), _round_up(N, 8))
    tm = _round_up(tm, 8)
    if -(-N // tm) < 2 and tm > 8:          # give both v7x TensorCores work
        tm = max(8, _round_up(-(-N // 2), 8))
    n_pad = _round_up(N, tm)
    if n_pad != N:
        x2d = jnp.pad(x2d, ((0, n_pad - N), (0, 0)))

    compiler_params_1d = pltpu.CompilerParams(
        dimension_semantics=("parallel",), vmem_limit_bytes=vmem_limit)
    compiler_params_2d = pltpu.CompilerParams(
        dimension_semantics=("parallel", "arbitrary"), vmem_limit_bytes=vmem_limit)

    if m_tiles == 1:
        # -------- resident fast path: weights fully in VMEM, no accumulator --------
        def _run(single_buffer):
            def _const_spec(shape):
                if single_buffer:
                    # never-changing blocks: one VMEM copy instead of a double buffer
                    return pl.BlockSpec(shape, lambda i: (0, 0),
                                        pipeline_mode=pl.Buffered(1))
                return pl.BlockSpec(shape, lambda i: (0, 0))

            return pl.pallas_call(
                _make_mlp_kernel(False, approximate_gelu),
                out_shape=jax.ShapeDtypeStruct((n_pad, Hp), out_dtype),
                grid_spec=pltpu.PrefetchScalarGridSpec(
                    num_scalar_prefetch=0,
                    grid=(n_pad // tm,),
                    in_specs=[
                        pl.BlockSpec((tm, Hp), lambda i: (i, 0)),   # x row tile
                        _const_spec((Hp, m_pad)),                   # fc1 weight
                        _const_spec((1, m_pad)),                    # fc1 bias
                        _const_spec((m_pad, Hp)),                   # fc2 weight
                        _const_spec((1, Hp)),                       # fc2 bias
                    ],
                    out_specs=pl.BlockSpec((tm, Hp), lambda i: (i, 0)),
                ),
                compiler_params=compiler_params_1d,
            )(x2d, w1, b1, w2, b2)

        try:
            out2d = _run(single_buffer=True)
            jax.block_until_ready(out2d)   # surface lowering/runtime issues now
        except Exception:
            out2d = _run(single_buffer=False)   # fallback: default double buffering
    else:
        # -------- tiled path: mlp_dim streamed, f32 accumulator over tiles --------
        out2d = pl.pallas_call(
            _make_mlp_kernel(True, approximate_gelu),
            out_shape=jax.ShapeDtypeStruct((n_pad, Hp), out_dtype),
            grid_spec=pltpu.PrefetchScalarGridSpec(
                num_scalar_prefetch=0,
                grid=(n_pad // tm, m_tiles),
                in_specs=[
                    pl.BlockSpec((tm, Hp), lambda i, j: (i, 0)),    # x row tile
                    pl.BlockSpec((Hp, mt), lambda i, j: (0, j)),    # fc1 weight slice
                    pl.BlockSpec((1, mt),  lambda i, j: (0, j)),    # fc1 bias slice
                    pl.BlockSpec((mt, Hp), lambda i, j: (j, 0)),    # fc2 weight slice
                    pl.BlockSpec((1, Hp),  lambda i, j: (0, 0)),    # fc2 bias
                ],
                out_specs=pl.BlockSpec((tm, Hp), lambda i, j: (i, 0)),
                scratch_shapes=[pltpu.VMEM((tm, Hp), jnp.float32)],
            ),
            compiler_params=compiler_params_2d,
        )(x2d, w1, b1, w2, b2)

    if n_pad != N:
        out2d = out2d[:N]
    if Hp != H:
        out2d = out2d[:, :H]
    return out2d.reshape(B, S, H)


# ---------------------------------------------------------------------------
# Reference + demo
# ---------------------------------------------------------------------------

def _xavier_uniform(key, fan_in, fan_out, dtype=jnp.float32):
    # matches torch.nn.init.xavier_uniform_ (gain=1)
    limit = math.sqrt(6.0 / (fan_in + fan_out))
    return jax.random.uniform(key, (fan_in, fan_out), dtype, minval=-limit, maxval=limit)


def _reference(x, w1, b1, w2, b2):
    B, S, H = x.shape
    h = x.reshape(-1, H).astype(jnp.float32) @ w1.astype(jnp.float32) + b1.reshape(1, -1)
    h = 0.5 * h * (1.0 + lax.erf(h * _INV_SQRT2))
    out = h @ w2.astype(jnp.float32) + b2.reshape(1, -1)
    return out.reshape(B, S, H)


if __name__ == "__main__":
    # Small shapes consistent with the module: hidden_size=32, mlp_dim=64,
    # tokens of shape (batch=2, seq=8, hidden=32).
    B, S, H, M = 2, 8, 32, 64

    key = jax.random.PRNGKey(0)
    kx, kw1, kb1, kw2, kb2 = jax.random.split(key, 5)

    x = jax.random.normal(kx, (B, S, H), dtype=jnp.float32)

    # Parameters initialized per Mlp._init_weights (xavier_uniform weights,
    # normal(std=1e-6) biases).  Weights stored as (in, out) = W.T of nn.Linear.
    w1 = _xavier_uniform(kw1, H, M)                                  # fc1: hidden -> mlp_dim
    b1 = (1e-6 * jax.random.normal(kb1, (M,))).astype(jnp.float32)
    w2 = _xavier_uniform(kw2, M, H)                                  # fc2: mlp_dim -> hidden
    b2 = (1e-6 * jax.random.normal(kb2, (H,))).astype(jnp.float32)

    ref = _reference(x, w1, b1, w2, b2)

    # f32 storage path (matches the PyTorch module dtype), exact erf GELU.
    out = mlp_pallas(x, w1, b1, w2, b2)
    jax.block_until_ready(out)
    assert out.shape == (B, S, H)
    assert jnp.allclose(out, ref, atol=1e-4, rtol=1e-4), "f32 mismatch vs reference"

    # bf16 path (MXU-native operands, f32 accumulation, bf16 output).
    out_bf16 = mlp_pallas(
        x.astype(jnp.bfloat16),
        w1.astype(jnp.bfloat16), b1,
        w2.astype(jnp.bfloat16), b2,
    )
    jax.block_until_ready(out_bf16)
    assert out_bf16.dtype == jnp.bfloat16
    assert jnp.allclose(out_bf16.astype(jnp.float32), ref, atol=1e-1, rtol=1e-1), \
        "bf16 mismatch vs reference"

    # tanh-approximate GELU path (EUP) — loose tolerance by construction.
    out_tanh = mlp_pallas(x, w1, b1, w2, b2, approximate_gelu=True)
    jax.block_until_ready(out_tanh)
    assert jnp.allclose(out_tanh, ref, atol=1e-1, rtol=1e-1), \
        "approximate-gelu mismatch vs reference"

    print("KERNEL_OK")
</pallas_src>

<mosaic_0001>
module attributes {stable_mosaic.version = 11 : i64} {
  func.func @kernel(%arg0: i32, %arg1: memref<8x128xf32, #tpu.memory_space<vmem>>, %arg2: memref<128x64xf32, #tpu.memory_space<vmem>>, %arg3: memref<1x64xf32, #tpu.memory_space<vmem>>, %arg4: memref<64x128xf32, #tpu.memory_space<vmem>>, %arg5: memref<1x128xf32, #tpu.memory_space<vmem>>, %arg6: memref<8x128xf32, #tpu.memory_space<vmem>>) attributes {dimension_semantics = [#tpu.dimension_semantics<parallel>], iteration_bounds = array<i64: 2>, scalar_prefetch = 0 : i64, scratch_operands = 0 : i64, tpu.core_type = #tpu.core_type<tc>, window_params = [{transform_indices = @transform_0, window_bounds = array<i64: 8, 128>}, {pipeline_mode = #tpu.pipeline_mode<synchronous>, transform_indices = @transform_1, window_bounds = array<i64: 128, 64>}, {pipeline_mode = #tpu.pipeline_mode<synchronous>, transform_indices = @transform_2, window_bounds = array<i64: 1, 64>}, {pipeline_mode = #tpu.pipeline_mode<synchronous>, transform_indices = @transform_3, window_bounds = array<i64: 64, 128>}, {pipeline_mode = #tpu.pipeline_mode<synchronous>, transform_indices = @transform_4, window_bounds = array<i64: 1, 128>}, {transform_indices = @transform_5, window_bounds = array<i64: 8, 128>}]} {
    %c0 = arith.constant 0 : index
    %c0_0 = arith.constant 0 : index
    %0 = vector.load %arg1[%c0, %c0_0] : memref<8x128xf32, #tpu.memory_space<vmem>>, vector<8x128xf32>
    %c0_1 = arith.constant 0 : index
    %c0_2 = arith.constant 0 : index
    %1 = vector.load %arg2[%c0_1, %c0_2] : memref<128x64xf32, #tpu.memory_space<vmem>>, vector<128x64xf32>
    %cst = arith.constant dense<0.000000e+00> : vector<8x64xf32>
    %2 = tpu.matmul %0, %1, %cst {dimension_numbers = #tpu.dot_dimension_numbers<[1], [0], [0], [1], [0, 0, 1, 1], [], []>} : vector<8x128xf32>, vector<128x64xf32>, vector<8x64xf32> -> vector<8x64xf32>
    %c0_3 = arith.constant 0 : index
    %c0_4 = arith.constant 0 : index
    %3 = vector.load %arg3[%c0_3, %c0_4] : memref<1x64xf32, #tpu.memory_space<vmem>>, vector<1x64xf32>
    %4 = vector.broadcast %3 : vector<1x64xf32> to vector<8x64xf32>
    %5 = arith.addf %2, %4 : vector<8x64xf32>
    %cst_5 = arith.constant 5.000000e-01 : f32
    %6 = vector.broadcast %cst_5 : f32 to vector<8x64xf32>
    %7 = arith.mulf %6, %5 : vector<8x64xf32>
    %cst_6 = arith.constant 0.707106769 : f32
    %8 = vector.broadcast %cst_6 : f32 to vector<8x64xf32>
    %9 = arith.mulf %5, %8 : vector<8x64xf32>
    %10 = math.erf %9 : vector<8x64xf32>
    %cst_7 = arith.constant 1.000000e+00 : f32
    %11 = vector.broadcast %cst_7 : f32 to vector<8x64xf32>
    %12 = arith.addf %11, %10 : vector<8x64xf32>
    %13 = arith.mulf %7, %12 : vector<8x64xf32>
    %c0_8 = arith.constant 0 : index
    %c0_9 = arith.constant 0 : index
    %14 = vector.load %arg4[%c0_8, %c0_9] : memref<64x128xf32, #tpu.memory_space<vmem>>, vector<64x128xf32>
    %cst_10 = arith.constant dense<0.000000e+00> : vector<8x128xf32>
    %15 = tpu.matmul %13, %14, %cst_10 {dimension_numbers = #tpu.dot_dimension_numbers<[1], [0], [0], [1], [0, 0, 1, 1], [], []>} : vector<8x64xf32>, vector<64x128xf32>, vector<8x128xf32> -> vector<8x128xf32>
    %c0_11 = arith.constant 0 : index
    %c0_12 = arith.constant 0 : index
    %16 = vector.load %arg5[%c0_11, %c0_12] : memref<1x128xf32, #tpu.memory_space<vmem>>, vector<1x128xf32>
    %17 = vector.broadcast %16 : vector<1x128xf32> to vector<8x128xf32>
    %18 = arith.addf %15, %17 : vector<8x128xf32>
    %c0_13 = arith.constant 0 : index
    %c0_14 = arith.constant 0 : index
    %19 = vector.load %arg6[%c0_13, %c0_14] : memref<8x128xf32, #tpu.memory_space<vmem>>, vector<8x128xf32>
    tpu.vector_store %arg6[%c0_13, %c0_14], %18 {strides = array<i32>} : memref<8x128xf32, #tpu.memory_space<vmem>>, vector<8x128xf32>,
    return
  }
  func.func @transform_0(%arg0: i32) -> (i32, i32) {
    %c0_i32 = arith.constant 0 : i32
    %c0_i32_0 = arith.constant 0 : i32
    return %arg0, %c0_i32 : i32, i32
  }
  func.func @transform_1(%arg0: i32) -> (i32, i32) {
    %c0_i32 = arith.constant 0 : i32
    %c0_i32_0 = arith.constant 0 : i32
    %c0_i32_1 = arith.constant 0 : i32
    return %c0_i32, %c0_i32_0 : i32, i32
  }
  func.func @transform_2(%arg0: i32) -> (i32, i32) {
    %c0_i32 = arith.constant 0 : i32
    %c0_i32_0 = arith.constant 0 : i32
    %c0_i32_1 = arith.constant 0 : i32
    return %c0_i32, %c0_i32_0 : i32, i32
  }
  func.func @transform_3(%arg0: i32) -> (i32, i32) {
    %c0_i32 = arith.constant 0 : i32
    %c0_i32_0 = arith.constant 0 : i32
    %c0_i32_1 = arith.constant 0 : i32
    return %c0_i32, %c0_i32_0 : i32, i32
  }
  func.func @transform_4(%arg0: i32) -> (i32, i32) {
    %c0_i32 = arith.constant 0 : i32
    %c0_i32_0 = arith.constant 0 : i32
    %c0_i32_1 = arith.constant 0 : i32
    return %c0_i32, %c0_i32_0 : i32, i32
  }
  func.func @transform_5(%arg0: i32) -> (i32, i32) {
    %c0_i32 = arith.constant 0 : i32
    %c0_i32_0 = arith.constant 0 : i32
    return %arg0, %c0_i32 : i32, i32
  }
}

module attributes {stable_mosaic.version = 11 : i64} {
  func.func @kernel(%arg0: i32, %arg1: memref<8x128xf32, #tpu.memory_space<vmem>>, %arg2: memref<128x64xf32, #tpu.memory_space<vmem>>, %arg3: memref<1x64xf32, #tpu.memory_space<vmem>>, %arg4: memref<64x128xf32, #tpu.memory_space<vmem>>, %arg5: memref<1x128xf32, #tpu.memory_space<vmem>>, %arg6: memref<8x128xf32, #tpu.memory_space<vmem>>) attributes {dimension_semantics = [#tpu.dimension_semantics<parallel>], iteration_bounds = array<i64: 2>, scalar_prefetch = 0 : i64, scratch_operands = 0 : i64, tpu.core_type = #tpu.core_type<tc>, window_params = [{transform_indices = @transform_0, window_bounds = array<i64: 8, 128>}, {pipeline_mode = #tpu.pipeline_mode<synchronous>, transform_indices = @transform_1, window_bounds = array<i64: 128, 64>}, {pipeline_mode = #tpu.pipeline_mode<synchronous>, transform_indices = @transform_2, window_bounds = array<i64: 1, 64>}, {pipeline_mode = #tpu.pipeline_mode<synchronous>, transform_indices = @transform_3, window_bounds = array<i64: 64, 128>}, {pipeline_mode = #tpu.pipeline_mode<synchronous>, transform_indices = @transform_4, window_bounds = array<i64: 1, 128>}, {transform_indices = @transform_5, window_bounds = array<i64: 8, 128>}]} {
    %c0 = arith.constant 0 : index
    %c0_0 = arith.constant 0 : index
    %0 = vector.load %arg1[%c0, %c0_0] : memref<8x128xf32, #tpu.memory_space<vmem>>, vector<8x128xf32>
    %c0_1 = arith.constant 0 : index
    %c0_2 = arith.constant 0 : index
    %1 = vector.load %arg2[%c0_1, %c0_2] : memref<128x64xf32, #tpu.memory_space<vmem>>, vector<128x64xf32>
    %cst = arith.constant dense<0.000000e+00> : vector<8x64xf32>
    %2 = tpu.matmul %0, %1, %cst {dimension_numbers = #tpu.dot_dimension_numbers<[1], [0], [0], [1], [0, 0, 1, 1], [], []>} : vector<8x128xf32>, vector<128x64xf32>, vector<8x64xf32> -> vector<8x64xf32>
    %c0_3 = arith.constant 0 : index
    %c0_4 = arith.constant 0 : index
    %3 = vector.load %arg3[%c0_3, %c0_4] : memref<1x64xf32, #tpu.memory_space<vmem>>, vector<1x64xf32>
    %4 = vector.broadcast %3 : vector<1x64xf32> to vector<8x64xf32>
    %5 = arith.addf %2, %4 : vector<8x64xf32>
    %cst_5 = arith.constant 5.000000e-01 : f32
    %6 = vector.broadcast %cst_5 : f32 to vector<8x64xf32>
    %7 = arith.mulf %6, %5 : vector<8x64xf32>
    %cst_6 = arith.constant 0.707106769 : f32
    %8 = vector.broadcast %cst_6 : f32 to vector<8x64xf32>
    %9 = arith.mulf %5, %8 : vector<8x64xf32>
    %10 = math.erf %9 : vector<8x64xf32>
    %cst_7 = arith.constant 1.000000e+00 : f32
    %11 = vector.broadcast %cst_7 : f32 to vector<8x64xf32>
    %12 = arith.addf %11, %10 : vector<8x64xf32>
    %13 = arith.mulf %7, %12 : vector<8x64xf32>
    %c0_8 = arith.constant 0 : index
    %c0_9 = arith.constant 0 : index
    %14 = vector.load %arg4[%c0_8, %c0_9] : memref<64x128xf32, #tpu.memory_space<vmem>>, vector<64x128xf32>
    %cst_10 = arith.constant dense<0.000000e+00> : vector<8x128xf32>
    %15 = tpu.matmul %13, %14, %cst_10 {dimension_numbers = #tpu.dot_dimension_numbers<[1], [0], [0], [1], [0, 0, 1, 1], [], []>} : vector<8x64xf32>, vector<64x128xf32>, vector<8x128xf32> -> vector<8x128xf32>
    %c0_11 = arith.constant 0 : index
    %c0_12 = arith.constant 0 : index
    %16 = vector.load %arg5[%c0_11, %c0_12] : memref<1x128xf32, #tpu.memory_space<vmem>>, vector<1x128xf32>
    %17 = vector.broadcast %16 : vector<1x128xf32> to vector<8x128xf32>
    %18 = arith.addf %15, %17 : vector<8x128xf32>
    %c0_13 = arith.constant 0 : index
    %c0_14 = arith.constant 0 : index
    %19 = vector.load %arg6[%c0_13, %c0_14] : memref<8x128xf32, #tpu.memory_space<vmem>>, vector<8x128xf32>
    tpu.vector_store %arg6[%c0_13, %c0_14], %18 {strides = array<i32>} : memref<8x128xf32, #tpu.memory_space<vmem>>, vector<8x128xf32>,
    return
  }
  func.func @transform_0(%arg0: i32) -> (i32, i32) {
    %c0_i32 = arith.constant 0 : i32
    %c0_i32_0 = arith.constant 0 : i32
    return %arg0, %c0_i32 : i32, i32
  }
  func.func @transform_1(%arg0: i32) -> (i32, i32) {
    %c0_i32 = arith.constant 0 : i32
    %c0_i32_0 = arith.constant 0 : i32
    %c0_i32_1 = arith.constant 0 : i32
    return %c0_i32, %c0_i32_0 : i32, i32
  }
  func.func @transform_2(%arg0: i32) -> (i32, i32) {
    %c0_i32 = arith.constant 0 : i32
    %c0_i32_0 = arith.constant 0 : i32
    %c0_i32_1 = arith.constant 0 : i32
    return %c0_i32, %c0_i32_0 : i32, i32
  }
  func.func @transform_3(%arg0: i32) -> (i32, i32) {
    %c0_i32 = arith.constant 0 : i32
    %c0_i32_0 = arith.constant 0 : i32
    %c0_i32_1 = arith.constant 0 : i32
    return %c0_i32, %c0_i32_0 : i32, i32
  }
  func.func @transform_4(%arg0: i32) -> (i32, i32) {
    %c0_i32 = arith.constant 0 : i32
    %c0_i32_0 = arith.constant 0 : i32
    %c0_i32_1 = arith.constant 0 : i32
    return %c0_i32, %c0_i32_0 : i32, i32
  }
  func.func @transform_5(%arg0: i32) -> (i32, i32) {
    %c0_i32 = arith.constant 0 : i32
    %c0_i32_0 = arith.constant 0 : i32
    return %arg0, %c0_i32 : i32, i32
  }
}

</mosaic_0001>

<llo_original>
// kernel: tpu_custom_call.1
$region0: #{tpu_custom_call.1}
  #allocation0 [shape = 'u32[]', space=smem, size = 0x4, offset = 0x4, fixed_abs, tag = 'smem constant byte address 0x4 - core index']
  #allocation1 [shape = 'u32[144,128]{1,0:T(1,128)}', space=vmem, size = 0x12000, scoped, tag = 'internal scratch']
  %s0 = inlined_call_operand.vmem [shape: f32[16,128], index: 0, kind: input, shape index: {}]
  %s1 = inlined_call_operand.vmem [shape: f32[128,64], index: 1, kind: input, shape index: {}]
  %s2 = inlined_call_operand.vmem [shape: f32[1,64], index: 2, kind: input, shape index: {}]
  %s3 = inlined_call_operand.vmem [shape: f32[64,128], index: 3, kind: input, shape index: {}]
  %s4 = inlined_call_operand.vmem [shape: f32[1,128], index: 4, kind: input, shape index: {}]
  %s5 = inlined_call_operand.hbm [shape: f32[16,128], index: 5, kind: output, shape index: {}]
  %s6 = sld [smem:[#allocation0]]
  $region53: #{tpu_custom_call.1} parent=0
    _
  %s8 = ssub.s32 1, %s6
  %s9 = scalar_select 0, %s8, %s6
  $region1: #{tpu_custom_call.1} parent=0
    #allocation2 [shape = 'u8[8192]{0}', space=vmem, size = 0x2000, scoped, tag = 'output window, operand 0']
    #allocation3 [shape = 's32[2]{0}', space=sflag, size = 0x8, scoped, tag = 'scoped memory for tpu_custom_call.1']
    %10 = vsyncpa [#allocation3], 0
    %s11 = scalar_lea.sflag [#allocation3], 1
    %12 = vsyncpa %s11, 0
    loop: start=0, step=1, limit=4
    $region2: #{tpu_custom_call.1} parent=1 // loop_pre_header
      _
    $region3: #{tpu_custom_call.1} parent=1 // loop_header
      %s14 = sphi 0, %s18
      %p15 = scmp.ge.s32.totalorder %s14, 4
      %s24 = sphi 0, %s26
      %s27 = sphi 0, %s24
      %s28 = sphi 0, %s27
      %s44 = sphi 0, %s28
      %s48 = sphi 0, %s48
      %s50 = sphi 0, %s48
      %s51 = sphi 0, %s50
      %s65 = sphi 0, %s51
      %s69 = sphi 0, %s69
      %s71 = sphi 0, %s69
      %s72 = sphi 0, %s71
      %s86 = sphi 0, %s72
      %s90 = sphi 0, %s90
      %s92 = sphi 0, %s90
      %s93 = sphi 0, %s92
      %s107 = sphi 0, %s93
      %s111 = sphi 0, %s111
      %s113 = sphi 0, %s111
      %s114 = sphi 0, %s113
      %s128 = sphi 0, %s114
      %s134 = sphi 0, %s136
      %s137 = sphi 0, %s134
      %s138 = sphi 0, %s137
      %s154 = sphi 0, %s138
    $region4: #{tpu_custom_call.1} parent=1 // loop_header_branch
      %17 = sbr.rel (%p15) target = $region8
    $region5: #{tpu_custom_call.1} parent=1 // loop_body
      %s19 = ssub.s32 %s14, 1
      %s20 = ssub.s32 %s14, 2
      %s21 = sadd.s32 %s14, 1
      %s22 = ssub.s32 %s14, %s21
      %p23 = scmp.eq.s32.totalorder %s22, 0
      %s25 = sadd.s32 %s24, 1
      %s26 = scalar_select %p23, %s24, %s25
      %p29 = pneg %p23
      %p30 = scmp.eq.s32.totalorder %s14, 1
      %p31 = por %p29, %p30
      %p32 = scmp.ne.s32.totalorder %s24, %s27
      %p33 = scmp.eq.s32.totalorder %s14, 0
      %p34 = por %p32, %p33
      %p35 = scmp.ne.s32.totalorder %s24, %s27
      %p36 = scmp.eq.s32.totalorder %s19, 1
      %p37 = por %p35, %p36
      %p38 = scmp.ne.s32.totalorder %s27, %s28
      %p39 = scmp.eq.s32.totalorder %s19, 0
      %p40 = por %p38, %p39
      %p41 = scmp.ne.s32.totalorder %s27, %s28
      %p42 = scmp.eq.s32.totalorder %s20, 1
      %p43 = por %p41, %p42
      %p45 = scmp.ne.s32.totalorder %s28, %s44
      %p46 = scmp.eq.s32.totalorder %s20, 0
      %p47 = por %p45, %p46
      %s49 = sadd.s32 %s48, 1
      %p52 = scmp.eq.s32.totalorder %s14, 1
      %p53 = scmp.ne.s32.totalorder %s48, %s50
      %p54 = scmp.eq.s32.totalorder %s14, 0
      %p55 = por %p53, %p54
      %p56 = scmp.ne.s32.totalorder %s48, %s50
      %p57 = scmp.eq.s32.totalorder %s19, 1
      %p58 = por %p56, %p57
      %p59 = scmp.ne.s32.totalorder %s50, %s51
      %p60 = scmp.eq.s32.totalorder %s19, 0
      %p61 = por %p59, %p60
      %p62 = scmp.ne.s32.totalorder %s50, %s51
      %p63 = scmp.eq.s32.totalorder %s20, 1
      %p64 = por %p62, %p63
      %p66 = scmp.ne.s32.totalorder %s51, %s65
      %p67 = scmp.eq.s32.totalorder %s20, 0
      %p68 = por %p66, %p67
      %s70 = sadd.s32 %s69, 1
      %p73 = scmp.eq.s32.totalorder %s14, 1
      %p74 = scmp.ne.s32.totalorder %s69, %s71
      %p75 = scmp.eq.s32.totalorder %s14, 0
      %p76 = por %p74, %p75
      %p77 = scmp.ne.s32.totalorder %s69, %s71
      %p78 = scmp.eq.s32.totalorder %s19, 1
      %p79 = por %p77, %p78
      %p80 = scmp.ne.s32.totalorder %s71, %s72
      %p81 = scmp.eq.s32.totalorder %s19, 0
      %p82 = por %p80, %p81
      %p83 = scmp.ne.s32.totalorder %s71, %s72
      %p84 = scmp.eq.s32.totalorder %s20, 1
      %p85 = por %p83, %p84
      %p87 = scmp.ne.s32.totalorder %s72, %s86
      %p88 = scmp.eq.s32.totalorder %s20, 0
      %p89 = por %p87, %p88
      %s91 = sadd.s32 %s90, 1
      %p94 = scmp.eq.s32.totalorder %s14, 1
      %p95 = scmp.ne.s32.totalorder %s90, %s92
      %p96 = scmp.eq.s32.totalorder %s14, 0
      %p97 = por %p95, %p96
      %p98 = scmp.ne.s32.totalorder %s90, %s92
      %p99 = scmp.eq.s32.totalorder %s19, 1
      %p100 = por %p98, %p99
      %p101 = scmp.ne.s32.totalorder %s92, %s93
      %p102 = scmp.eq.s32.totalorder %s19, 0
      %p103 = por %p101, %p102
      %p104 = scmp.ne.s32.totalorder %s92, %s93
      %p105 = scmp.eq.s32.totalorder %s20, 1
      %p106 = por %p104, %p105
      %p108 = scmp.ne.s32.totalorder %s93, %s107
      %p109 = scmp.eq.s32.totalorder %s20, 0
      %p110 = por %p108, %p109
      %s112 = sadd.s32 %s111, 1
      %p115 = scmp.eq.s32.totalorder %s14, 1
      %p116 = scmp.ne.s32.totalorder %s111, %s113
      %p117 = scmp.eq.s32.totalorder %s14, 0
      %p118 = por %p116, %p117
      %p119 = scmp.ne.s32.totalorder %s111, %s113
      %p120 = scmp.eq.s32.totalorder %s19, 1
      %p121 = por %p119, %p120
      %p122 = scmp.ne.s32.totalorder %s113, %s114
      %p123 = scmp.eq.s32.totalorder %s19, 0
      %p124 = por %p122, %p123
      %p125 = scmp.ne.s32.totalorder %s113, %s114
      %p126 = scmp.eq.s32.totalorder %s20, 1
      %p127 = por %p125, %p126
      %p129 = scmp.ne.s32.totalorder %s114, %s128
      %p130 = scmp.eq.s32.totalorder %s20, 0
      %p131 = por %p129, %p130
      %s132 = ssub.s32 %s14, %s21
      %p133 = scmp.eq.s32.totalorder %s132, 0
      %s135 = sadd.s32 %s134, 1
      %s136 = scalar_select %p133, %s134, %s135
      %p139 = pneg %p133
      %p140 = scmp.eq.s32.totalorder %s14, 1
      %p141 = por %p139, %p140
      %p142 = scmp.ne.s32.totalorder %s134, %s137
      %p143 = scmp.eq.s32.totalorder %s14, 0
      %p144 = por %p142, %p143
      %p145 = scmp.ne.s32.totalorder %s134, %s137
      %p146 = scmp.eq.s32.totalorder %s19, 1
      %p147 = por %p145, %p146
      %p148 = scmp.ne.s32.totalorder %s137, %s138
      %p149 = scmp.eq.s32.totalorder %s19, 0
      %p150 = por %p148, %p149
      %p151 = scmp.ne.s32.totalorder %s137, %s138
      %p152 = scmp.eq.s32.totalorder %s20, 1
      %p153 = por %p151, %p152
      %p155 = scmp.ne.s32.totalorder %s138, %s154
      %p156 = scmp.eq.s32.totalorder %s20, 0
      %p157 = por %p155, %p156
      %p158 = scmp.le.s32.totalorder 1, %s14
      %p159 = scmp.lt.s32.totalorder %s14, 3
      %p160 = pnand %p158, %p159
      %p161 = pneg %p160
      // Predicated region
      $region9: #{tpu_custom_call.1} parent=5 // pred_check
        _
      $region10: #{tpu_custom_call.1} parent=5 // pred_check_branch
        %163 = sbr.rel (%p160) target = $region12
      $region11: #{tpu_custom_call.1} parent=5 // pred_region
        %s164 = ssub.s32 %s14, 1
        // Predicated region
        $region13: #{tpu_custom_call.1} parent=11 // pred_check
          %p165 = pneg %p61
        $region14: #{tpu_custom_call.1} parent=11 // pred_check_branch
          %167 = sbr.rel (%p165) target = $region16
        $region15: #{tpu_custom_call.1} parent=11 // pred_region
          _
        $region16: #{tpu_custom_call.1} parent=11 // pred_fallthru
          _
        // Predicated region
        $region17: #{tpu_custom_call.1} parent=11 // pred_check
          %p168 = pneg %p82
        $region18: #{tpu_custom_call.1} parent=11 // pred_check_branch
          %170 = sbr.rel (%p168) target = $region20
        $region19: #{tpu_custom_call.1} parent=11 // pred_region
          _
        $region20: #{tpu_custom_call.1} parent=11 // pred_fallthru
          _
        // Predicated region
        $region21: #{tpu_custom_call.1} parent=11 // pred_check
          %p171 = pneg %p103
        $region22: #{tpu_custom_call.1} parent=11 // pred_check_branch
          %173 = sbr.rel (%p171) target = $region24
        $region23: #{tpu_custom_call.1} parent=11 // pred_region
          _
        $region24: #{tpu_custom_call.1} parent=11 // pred_fallthru
          _
        // Predicated region
        $region25: #{tpu_custom_call.1} parent=11 // pred_check
          %p174 = pneg %p124
        $region26: #{tpu_custom_call.1} parent=11 // pred_check_branch
          %176 = sbr.rel (%p174) target = $region28
        $region27: #{tpu_custom_call.1} parent=11 // pred_region
          _
        $region28: #{tpu_custom_call.1} parent=11 // pred_fallthru
          _
      $region12: #{tpu_custom_call.1} parent=5 // pred_fallthru
        _
      %p177 = scmp.lt.s32.totalorder %s14, 2
      // Predicated region
      $region29: #{tpu_custom_call.1} parent=5 // pred_check
        %p178 = pneg %p177
      $region30: #{tpu_custom_call.1} parent=5 // pred_check_branch
        %180 = sbr.rel (%p178) target = $region32
      $region31: #{tpu_custom_call.1} parent=5 // pred_region
        // Predicated region
        $region33: #{tpu_custom_call.1} parent=31 // pred_check
          %p181 = pneg %p34
        $region34: #{tpu_custom_call.1} parent=31 // pred_check_branch
          %183 = sbr.rel (%p181) target = $region36
        $region35: #{tpu_custom_call.1} parent=31 // pred_region
          %p184 = scmp.lt.s32.totalorder %s14, 1
          %s185 = scalar_select %p184, %s14, 1
          %s186 = smul.addr %s185, 8
          %s187 = scalar_lea.vmem %s0, %s186
        $region36: #{tpu_custom_call.1} parent=31 // pred_fallthru
          _
      $region32: #{tpu_custom_call.1} parent=5 // pred_fallthru
        _
      %p188 = scmp.le.s32.totalorder 1, %s14
      %p189 = scmp.lt.s32.totalorder %s14, 3
      %p190 = pnand %p188, %p189
      %p191 = pneg %p190
      // Predicated region
      $region37: #{tpu_custom_call.1} parent=5 // pred_check
        _
      $region38: #{tpu_custom_call.1} parent=5 // pred_check_branch
        %193 = sbr.rel (%p190) target = $region40
      $region39: #{tpu_custom_call.1} parent=5 // pred_region
        %s194 = ssub.s32 %s14, 1
        %p195 = scmp.lt.s32.totalorder %s19, 1
        %s196 = scalar_select %p195, %s19, 1
        %s197 = smul.addr %s196, 8
        %s198 = scalar_lea.vmem %s0, %s197
        %p199 = pneg %p40
        %p200 = pneg %p37
        %p201 = pneg %p61
        %p202 = pneg %p58
        %p203 = pneg %p82
        %p204 = pneg %p79
        %p205 = pneg %p103
        %p206 = pneg %p100
        %p207 = pneg %p124
        %p208 = pneg %p121
        %p209 = pneg %p150
        %p210 = pneg %p147
        %s211 = sand.u32 %s137, 1
        %s212 = scalar_lea.sflag [#allocation3], %s211
        %s213 = sand.u32 %s137, 1
        %s214 = smul.addr %s213, 8
        %s215 = scalar_lea.vmem [#allocation2], %s214
        %p216 = scmp.lt.s32.totalorder %s19, 1
        %s217 = scalar_select %p216, %s19, 1
        %s218 = smul.addr %s217, 8
        %s219 = scalar_lea.vmem %s0, %s218
        %v220 = vld [vmem:[%s219] sm:$0xff]
        %v221 = vld [vmem:[%s1] sm:$0xff]
        %v222 = vld [vmem:[%s1 + $0x8] sm:$0xff]
        %v223 = vld [vmem:[%s1 + $0x10] sm:$0xff]
        %v224 = vld [vmem:[%s1 + $0x18] sm:$0xff]
        %v225 = vld [vmem:[%s1 + $0x20] sm:$0xff]
        %v226 = vld [vmem:[%s1 + $0x28] sm:$0xff]
        %v227 = vld [vmem:[%s1 + $0x30] sm:$0xff]
        %v228 = vld [vmem:[%s1 + $0x38] sm:$0xff]
        %v229 = vld [vmem:[%s1 + $0x40] sm:$0xff]
        %v230 = vld [vmem:[%s1 + $0x48] sm:$0xff]
        %v231 = vld [vmem:[%s1 + $0x50] sm:$0xff]
        %v232 = vld [vmem:[%s1 + $0x58] sm:$0xff]
        %v233 = vld [vmem:[%s1 + $0x60] sm:$0xff]
        %v234 = vld [vmem:[%s1 + $0x68] sm:$0xff]
        %v235 = vld [vmem:[%s1 + $0x70] sm:$0xff]
        %v236 = vld [vmem:[%s1 + $0x78] sm:$0xff]
        %v237 = vld [vmem:[%s2] sm:$0x1]
        %v239 = vlaneseq
        %v240 = vshrl.u32 %v239, 7
        %v241 = vsub.s32 0, %v240
        %v242 = vrot.slane %v237, %v241
        %244 = vmatprep.subr.mxu0 0.0
        %245 = vmatpush1.msra.mxu0 %v221
        %246 = vmatprep.subr.mxu0 0.0
        %247 = vmatpush1.msra.mxu0 %v222
        %248 = vmatprep.subr.mxu0 0.0
        %249 = vmatpush1.msra.mxu0 %v223
        %250 = vmatprep.subr.mxu0 0.0
        %251 = vmatpush1.msra.mxu0 %v224
        %252 = vmatprep.subr.mxu0 0.0
        %253 = vmatpush1.msra.mxu0 %v225
        %254 = vmatprep.subr.mxu0 0.0
        %255 = vmatpush1.msra.mxu0 %v226
        %256 = vmatprep.subr.mxu0 0.0
        %257 = vmatpush1.msra.mxu0 %v227
        %258 = vmatprep.subr.mxu0 0.0
        %259 = vmatpush1.msra.mxu0 %v228
        %260 = vmatprep.subr.mxu0 0.0
        %261 = vmatpush1.msra.mxu0 %v229
        %262 = vmatprep.subr.mxu0 0.0
        %263 = vmatpush1.msra.mxu0 %v230
        %264 = vmatprep.subr.mxu0 0.0
        %265 = vmatpush1.msra.mxu0 %v231
        %266 = vmatprep.subr.mxu0 0.0
        %267 = vmatpush1.msra.mxu0 %v232
        %268 = vmatprep.subr.mxu0 0.0
        %269 = vmatpush1.msra.mxu0 %v233
        %270 = vmatprep.subr.mxu0 0.0
        %271 = vmatpush1.msra.mxu0 %v234
        %272 = vmatprep.subr.mxu0 0.0
        %273 = vmatpush1.msra.mxu0 %v235
        %274 = vmatprep.subr.mxu0 0.0
        %275 = vmatpush1.msra.mxu0 %v236
        %276 = vmatprep.subr.mxu0 0.0
        %277 = vmatpush1.msra.mxu0 0.0
        %278 = vmatprep.subr.mxu0 0.0
        %279 = vmatpush1.msra.mxu0 0.0
        %280 = vmatprep.subr.mxu0 0.0
        %281 = vmatpush1.msra.mxu0 0.0
        %282 = vmatprep.subr.mxu0 0.0
        %283 = vmatpush1.msra.mxu0 0.0
        %284 = vmatprep.subr.mxu0 0.0
        %285 = vmatpush1.msra.mxu0 0.0
        %286 = vmatprep.subr.mxu0 0.0
        %287 = vmatpush1.msra.mxu0 0.0
        %288 = vmatprep.subr.mxu0 0.0
        %289 = vmatpush1.msra.mxu0 0.0
        %290 = vmatprep.subr.mxu0 0.0
        %291 = vmatpush1.msra.mxu0 0.0
        %292 = vmatprep.subr.mxu0 0.0
        %293 = vmatpush1.msra.mxu0 0.0
        %294 = vmatprep.subr.mxu0 0.0
        %295 = vmatpush1.msra.mxu0 0.0
        %296 = vmatprep.subr.mxu0 0.0
        %297 = vmatpush1.msra.mxu0 0.0
        %298 = vmatprep.subr.mxu0 0.0
        %299 = vmatpush1.msra.mxu0 0.0
        %300 = vmatprep.subr.mxu0 0.0
        %301 = vmatpush1.msra.mxu0 0.0
        %302 = vmatprep.subr.mxu0 0.0
        %303 = vmatpush1.msra.mxu0 0.0
        %304 = vmatprep.subr.mxu0 0.0
        %305 = vmatpush1.msra.mxu0 0.0
        %306 = vmatprep.subr.mxu0 0.0
        %307 = vmatpush1.msra.mxu0 0.0
        %308 = vmatprep.mubr.f32.mxu0 0.0
        %309 = vmatmul.mubr.f32.gmra.mrb[0].mxu0 %v220
        %v310 = vpop.f32.mrb[0].mxu0
        %v311 = vadd.f32 %v242, %v310
        %v312 = vpop.f32.mrb[0].mxu0
        %313 = vdwg.mxu0
        %v314 = vmul.f32 %v311, 0.5
        %v315 = vmul.f32 %v311, 0.70710677
        %v316 = verf.f32.pop %v315
        %v317 = vadd.f32 %v316, 1.0
        %v318 = vmul.f32 %v314, %v317
        %v319 = vld [vmem:[%s3] sm:$0xff]
        %v320 = vld [vmem:[%s3 + $0x8] sm:$0xff]
        %v321 = vld [vmem:[%s3 + $0x10] sm:$0xff]
        %v322 = vld [vmem:[%s3 + $0x18] sm:$0xff]
        %v323 = vld [vmem:[%s3 + $0x20] sm:$0xff]
        %v324 = vld [vmem:[%s3 + $0x28] sm:$0xff]
        %v325 = vld [vmem:[%s3 + $0x30] sm:$0xff]
        %v326 = vld [vmem:[%s3 + $0x38] sm:$0xff]
        %v327 = vld [vmem:[%s4] sm:$0x1]
        %v329 = vlaneseq
        %v330 = vshrl.u32 %v329, 7
        %v331 = vsub.s32 0, %v330
        %v332 = vrot.slane %v327, %v331
        %vm334 = vcmask 523264
        %v336 = vsel %vm334, %v318, 0
        %338 = vmatprep.subr.mxu0 0.0
        %339 = vmatpush1.msra.mxu0 %v319
        %340 = vmatprep.subr.mxu0 0.0
        %341 = vmatpush1.msra.mxu0 %v320
        %342 = vmatprep.subr.mxu0 0.0
        %343 = vmatpush1.msra.mxu0 %v321
        %344 = vmatprep.subr.mxu0 0.0
        %345 = vmatpush1.msra.mxu0 %v322
        %346 = vmatprep.subr.mxu0 0.0
        %347 = vmatpush1.msra.mxu0 %v323
        %348 = vmatprep.subr.mxu0 0.0
        %349 = vmatpush1.msra.mxu0 %v324
        %350 = vmatprep.subr.mxu0 0.0
        %351 = vmatpush1.msra.mxu0 %v325
        %352 = vmatprep.subr.mxu0 0.0
        %353 = vmatpush1.msra.mxu0 %v326
        %354 = vmatprep.subr.mxu0 0.0
        %355 = vmatpush1.msra.mxu0 0.0
        %356 = vmatprep.subr.mxu0 0.0
        %357 = vmatpush1.msra.mxu0 0.0
        %358 = vmatprep.subr.mxu0 0.0
        %359 = vmatpush1.msra.mxu0 0.0
        %360 = vmatprep.subr.mxu0 0.0
        %361 = vmatpush1.msra.mxu0 0.0
        %362 = vmatprep.subr.mxu0 0.0
        %363 = vmatpush1.msra.mxu0 0.0
        %364 = vmatprep.subr.mxu0 0.0
        %365 = vmatpush1.msra.mxu0 0.0
        %366 = vmatprep.subr.mxu0 0.0
        %367 = vmatpush1.msra.mxu0 0.0
        %368 = vmatprep.subr.mxu0 0.0
        %369 = vmatpush1.msra.mxu0 0.0
        %370 = vmatprep.subr.mxu0 0.0
        %371 = vmatpush1.msra.mxu0 0.0
        %372 = vmatprep.subr.mxu0 0.0
        %373 = vmatpush1.msra.mxu0 0.0
        %374 = vmatprep.subr.mxu0 0.0
        %375 = vmatpush1.msra.mxu0 0.0
        %376 = vmatprep.subr.mxu0 0.0
        %377 = vmatpush1.msra.mxu0 0.0
        %378 = vmatprep.subr.mxu0 0.0
        %379 = vmatpush1.msra.mxu0 0.0
        %380 = vmatprep.subr.mxu0 0.0
        %381 = vmatpush1.msra.mxu0 0.0
        %382 = vmatprep.subr.mxu0 0.0
        %383 = vmatpush1.msra.mxu0 0.0
        %384 = vmatprep.subr.mxu0 0.0
        %385 = vmatpush1.msra.mxu0 0.0
        %386 = vmatprep.subr.mxu0 0.0
        %387 = vmatpush1.msra.mxu0 0.0
        %388 = vmatprep.subr.mxu0 0.0
        %389 = vmatpush1.msra.mxu0 0.0
        %390 = vmatprep.subr.mxu0 0.0
        %391 = vmatpush1.msra.mxu0 0.0
        %392 = vmatprep.subr.mxu0 0.0
        %393 = vmatpush1.msra.mxu0 0.0
        %394 = vmatprep.subr.mxu0 0.0
        %395 = vmatpush1.msra.mxu0 0.0
        %396 = vmatprep.subr.mxu0 0.0
        %397 = vmatpush1.msra.mxu0 0.0
        %398 = vmatprep.subr.mxu0 0.0
        %399 = vmatpush1.msra.mxu0 0.0
        %400 = vmatprep.subr.mxu0 0.0
        %401 = vmatpush1.msra.mxu0 0.0
        %402 = vmatprep.mubr.f32.mxu0 0.0
        %403 = vmatmul.mubr.f32.gmra.mrb[0].mxu0 %v336
        %v404 = vpop.f32.mrb[0].mxu0
        %v405 = vadd.f32 %v332, %v404
        %v406 = vpop.f32.mrb[0].mxu0
        %407 = vdwg.mxu0
        %408 = vst [vmem:[%s215] sm:$0xff] %v405
        %s409 = sand.u32 %s137, 1
        %s410 = scalar_lea.sflag [#allocation3], %s409
        %s411 = sand.u32 %s137, 1
        %s412 = smul.addr %s411, 8
        %s413 = scalar_lea.vmem [#allocation2], %s412
        // Predicated region
        $region41: #{tpu_custom_call.1} parent=39 // pred_check
          %p414 = pneg %p147
        $region42: #{tpu_custom_call.1} parent=39 // pred_check_branch
          %416 = sbr.rel (%p414) target = $region44
        $region43: #{tpu_custom_call.1} parent=39 // pred_region
          %s418 = ssub.s32 128, 128
          %419 = vsyncadd %s410, %s418
          %s420 = smul.addr %s19, 128
          %s421 = scalar_lea.hbm %s5, %s420
          %s423 = sshll.u32 %s413, 4
          %s424 = int_to_ptr.vmem [resolvable:$true] %s423
          %426 = dma.vmem_to_hbm [thread:$0]  %s424, 128, %s421, %s410
        $region44: #{tpu_custom_call.1} parent=39 // pred_fallthru
          _
      $region40: #{tpu_custom_call.1} parent=5 // pred_fallthru
        _
      %p427 = scmp.le.s32.totalorder 2, %s14
      // Predicated region
      $region45: #{tpu_custom_call.1} parent=5 // pred_check
        %p428 = pneg %p427
      $region46: #{tpu_custom_call.1} parent=5 // pred_check_branch
        %430 = sbr.rel (%p428) target = $region48
      $region47: #{tpu_custom_call.1} parent=5 // pred_region
        %s431 = ssub.s32 %s14, 2
        // Predicated region
        $region49: #{tpu_custom_call.1} parent=47 // pred_check
          %p432 = pneg %p153
        $region50: #{tpu_custom_call.1} parent=47 // pred_check_branch
          %434 = sbr.rel (%p432) target = $region52
        $region51: #{tpu_custom_call.1} parent=47 // pred_region
          %s435 = sand.u32 %s138, 1
          %s436 = scalar_lea.sflag [#allocation3], %s435
          %s437 = sand.u32 %s138, 1
          %s438 = smul.addr %s437, 8
          %s439 = scalar_lea.vmem [#allocation2], %s438
          %440 = dma.done %s436, 128
        $region52: #{tpu_custom_call.1} parent=47 // pred_fallthru
          _
      $region48: #{tpu_custom_call.1} parent=5 // pred_fallthru
        _
    $region6: #{tpu_custom_call.1} parent=1 // loop_footer
      %s18 = sadd.s32 1, %s14
    $region7: #{tpu_custom_call.1} parent=1 // loop_footer_branch
      %13 = sbr.rel target = $region3
    $region8: #{tpu_custom_call.1} parent=1 // loop_exit
      _
    %441 = vsyncpa [#allocation3], 1
    %s442 = scalar_lea.sflag [#allocation3], 1
    %443 = vsyncpa %s442, 1

// kernel: tpu_custom_call.1
$region0: #{tpu_custom_call.1}
  #allocation0 [shape = 'u32[]', space=smem, size = 0x4, offset = 0x4, fixed_abs, tag = 'smem constant byte address 0x4 - core index']
  #allocation1 [shape = 'u32[144,128]{1,0:T(1,128)}', space=vmem, size = 0x12000, scoped, tag = 'internal scratch']
  %s0 = inlined_call_operand.vmem [shape: f32[16,128], index: 0, kind: input, shape index: {}]
  %s1 = inlined_call_operand.vmem [shape: f32[128,64], index: 1, kind: input, shape index: {}]
  %s2 = inlined_call_operand.vmem [shape: f32[1,64], index: 2, kind: input, shape index: {}]
  %s3 = inlined_call_operand.vmem [shape: f32[64,128], index: 3, kind: input, shape index: {}]
  %s4 = inlined_call_operand.vmem [shape: f32[1,128], index: 4, kind: input, shape index: {}]
  %s5 = inlined_call_operand.hbm [shape: f32[16,128], index: 5, kind: output, shape index: {}]
  %s6 = sld [smem:[#allocation0]]
  $region53: #{tpu_custom_call.1} parent=0
    _
  %s8 = ssub.s32 1, %s6
  %s9 = scalar_select 0, %s8, %s6
  $region1: #{tpu_custom_call.1} parent=0
    #allocation2 [shape = 'u8[8192]{0}', space=vmem, size = 0x2000, scoped, tag = 'output window, operand 0']
    #allocation3 [shape = 's32[2]{0}', space=sflag, size = 0x8, scoped, tag = 'scoped memory for tpu_custom_call.1']
    %10 = vsyncpa [#allocation3], 0
    %s11 = scalar_lea.sflag [#allocation3], 1
    %12 = vsyncpa %s11, 0
    loop: start=0, step=1, limit=4
    $region2: #{tpu_custom_call.1} parent=1 // loop_pre_header
      _
    $region3: #{tpu_custom_call.1} parent=1 // loop_header
      %s14 = sphi 0, %s18
      %p15 = scmp.ge.s32.totalorder %s14, 4
      %s24 = sphi 0, %s26
      %s27 = sphi 0, %s24
      %s28 = sphi 0, %s27
      %s44 = sphi 0, %s28
      %s48 = sphi 0, %s48
      %s50 = sphi 0, %s48
      %s51 = sphi 0, %s50
      %s65 = sphi 0, %s51
      %s69 = sphi 0, %s69
      %s71 = sphi 0, %s69
      %s72 = sphi 0, %s71
      %s86 = sphi 0, %s72
      %s90 = sphi 0, %s90
      %s92 = sphi 0, %s90
      %s93 = sphi 0, %s92
      %s107 = sphi 0, %s93
      %s111 = sphi 0, %s111
      %s113 = sphi 0, %s111
      %s114 = sphi 0, %s113
      %s128 = sphi 0, %s114
      %s134 = sphi 0, %s136
      %s137 = sphi 0, %s134
      %s138 = sphi 0, %s137
      %s154 = sphi 0, %s138
    $region4: #{tpu_custom_call.1} parent=1 // loop_header_branch
      %17 = sbr.rel (%p15) target = $region8
    $region5: #{tpu_custom_call.1} parent=1 // loop_body
      %s19 = ssub.s32 %s14, 1
      %s20 = ssub.s32 %s14, 2
      %s21 = sadd.s32 %s14, 1
      %s22 = ssub.s32 %s14, %s21
      %p23 = scmp.eq.s32.totalorder %s22, 0
      %s25 = sadd.s32 %s24, 1
      %s26 = scalar_select %p23, %s24, %s25
      %p29 = pneg %p23
      %p30 = scmp.eq.s32.totalorder %s14, 1
      %p31 = por %p29, %p30
      %p32 = scmp.ne.s32.totalorder %s24, %s27
      %p33 = scmp.eq.s32.totalorder %s14, 0
      %p34 = por %p32, %p33
      %p35 = scmp.ne.s32.totalorder %s24, %s27
      %p36 = scmp.eq.s32.totalorder %s19, 1
      %p37 = por %p35, %p36
      %p38 = scmp.ne.s32.totalorder %s27, %s28
      %p39 = scmp.eq.s32.totalorder %s19, 0
      %p40 = por %p38, %p39
      %p41 = scmp.ne.s32.totalorder %s27, %s28
      %p42 = scmp.eq.s32.totalorder %s20, 1
      %p43 = por %p41, %p42
      %p45 = scmp.ne.s32.totalorder %s28, %s44
      %p46 = scmp.eq.s32.totalorder %s20, 0
      %p47 = por %p45, %p46
      %s49 = sadd.s32 %s48, 1
      %p52 = scmp.eq.s32.totalorder %s14, 1
      %p53 = scmp.ne.s32.totalorder %s48, %s50
      %p54 = scmp.eq.s32.totalorder %s14, 0
      %p55 = por %p53, %p54
      %p56 = scmp.ne.s32.totalorder %s48, %s50
      %p57 = scmp.eq.s32.totalorder %s19, 1
      %p58 = por %p56, %p57
      %p59 = scmp.ne.s32.totalorder %s50, %s51
      %p60 = scmp.eq.s32.totalorder %s19, 0
      %p61 = por %p59, %p60
      %p62 = scmp.ne.s32.totalorder %s50, %s51
      %p63 = scmp.eq.s32.totalorder %s20, 1
      %p64 = por %p62, %p63
      %p66 = scmp.ne.s32.totalorder %s51, %s65
      %p67 = scmp.eq.s32.totalorder %s20, 0
      %p68 = por %p66, %p67
      %s70 = sadd.s32 %s69, 1
      %p73 = scmp.eq.s32.totalorder %s14, 1
      %p74 = scmp.ne.s32.totalorder %s69, %s71
      %p75 = scmp.eq.s32.totalorder %s14, 0
      %p76 = por %p74, %p75
      %p77 = scmp.ne.s32.totalorder %s69, %s71
      %p78 = scmp.eq.s32.totalorder %s19, 1
      %p79 = por %p77, %p78
      %p80 = scmp.ne.s32.totalorder %s71, %s72
      %p81 = scmp.eq.s32.totalorder %s19, 0
      %p82 = por %p80, %p81
      %p83 = scmp.ne.s32.totalorder %s71, %s72
      %p84 = scmp.eq.s32.totalorder %s20, 1
      %p85 = por %p83, %p84
      %p87 = scmp.ne.s32.totalorder %s72, %s86
      %p88 = scmp.eq.s32.totalorder %s20, 0
      %p89 = por %p87, %p88
      %s91 = sadd.s32 %s90, 1
      %p94 = scmp.eq.s32.totalorder %s14, 1
      %p95 = scmp.ne.s32.totalorder %s90, %s92
      %p96 = scmp.eq.s32.totalorder %s14, 0
      %p97 = por %p95, %p96
      %p98 = scmp.ne.s32.totalorder %s90, %s92
      %p99 = scmp.eq.s32.totalorder %s19, 1
      %p100 = por %p98, %p99
      %p101 = scmp.ne.s32.totalorder %s92, %s93
      %p102 = scmp.eq.s32.totalorder %s19, 0
      %p103 = por %p101, %p102
      %p104 = scmp.ne.s32.totalorder %s92, %s93
      %p105 = scmp.eq.s32.totalorder %s20, 1
      %p106 = por %p104, %p105
      %p108 = scmp.ne.s32.totalorder %s93, %s107
      %p109 = scmp.eq.s32.totalorder %s20, 0
      %p110 = por %p108, %p109
      %s112 = sadd.s32 %s111, 1
      %p115 = scmp.eq.s32.totalorder %s14, 1
      %p116 = scmp.ne.s32.totalorder %s111, %s113
      %p117 = scmp.eq.s32.totalorder %s14, 0
      %p118 = por %p116, %p117
      %p119 = scmp.ne.s32.totalorder %s111, %s113
      %p120 = scmp.eq.s32.totalorder %s19, 1
      %p121 = por %p119, %p120
      %p122 = scmp.ne.s32.totalorder %s113, %s114
      %p123 = scmp.eq.s32.totalorder %s19, 0
      %p124 = por %p122, %p123
      %p125 = scmp.ne.s32.totalorder %s113, %s114
      %p126 = scmp.eq.s32.totalorder %s20, 1
      %p127 = por %p125, %p126
      %p129 = scmp.ne.s32.totalorder %s114, %s128
      %p130 = scmp.eq.s32.totalorder %s20, 0
      %p131 = por %p129, %p130
      %s132 = ssub.s32 %s14, %s21
      %p133 = scmp.eq.s32.totalorder %s132, 0
      %s135 = sadd.s32 %s134, 1
      %s136 = scalar_select %p133, %s134, %s135
      %p139 = pneg %p133
      %p140 = scmp.eq.s32.totalorder %s14, 1
      %p141 = por %p139, %p140
      %p142 = scmp.ne.s32.totalorder %s134, %s137
      %p143 = scmp.eq.s32.totalorder %s14, 0
      %p144 = por %p142, %p143
      %p145 = scmp.ne.s32.totalorder %s134, %s137
      %p146 = scmp.eq.s32.totalorder %s19, 1
      %p147 = por %p145, %p146
      %p148 = scmp.ne.s32.totalorder %s137, %s138
      %p149 = scmp.eq.s32.totalorder %s19, 0
      %p150 = por %p148, %p149
      %p151 = scmp.ne.s32.totalorder %s137, %s138
      %p152 = scmp.eq.s32.totalorder %s20, 1
      %p153 = por %p151, %p152
      %p155 = scmp.ne.s32.totalorder %s138, %s154
      %p156 = scmp.eq.s32.totalorder %s20, 0
      %p157 = por %p155, %p156
      %p158 = scmp.le.s32.totalorder 1, %s14
      %p159 = scmp.lt.s32.totalorder %s14, 3
      %p160 = pnand %p158, %p159
      %p161 = pneg %p160
      // Predicated region
      $region9: #{tpu_custom_call.1} parent=5 // pred_check
        _
      $region10: #{tpu_custom_call.1} parent=5 // pred_check_branch
        %163 = sbr.rel (%p160) target = $region12
      $region11: #{tpu_custom_call.1} parent=5 // pred_region
        %s164 = ssub.s32 %s14, 1
        // Predicated region
        $region13: #{tpu_custom_call.1} parent=11 // pred_check
          %p165 = pneg %p61
        $region14: #{tpu_custom_call.1} parent=11 // pred_check_branch
          %167 = sbr.rel (%p165) target = $region16
        $region15: #{tpu_custom_call.1} parent=11 // pred_region
          _
        $region16: #{tpu_custom_call.1} parent=11 // pred_fallthru
          _
        // Predicated region
        $region17: #{tpu_custom_call.1} parent=11 // pred_check
          %p168 = pneg %p82
        $region18: #{tpu_custom_call.1} parent=11 // pred_check_branch
          %170 = sbr.rel (%p168) target = $region20
        $region19: #{tpu_custom_call.1} parent=11 // pred_region
          _
        $region20: #{tpu_custom_call.1} parent=11 // pred_fallthru
          _
        // Predicated region
        $region21: #{tpu_custom_call.1} parent=11 // pred_check
          %p171 = pneg %p103
        $region22: #{tpu_custom_call.1} parent=11 // pred_check_branch
          %173 = sbr.rel (%p171) target = $region24
        $region23: #{tpu_custom_call.1} parent=11 // pred_region
          _
        $region24: #{tpu_custom_call.1} parent=11 // pred_fallthru
          _
        // Predicated region
        $region25: #{tpu_custom_call.1} parent=11 // pred_check
          %p174 = pneg %p124
        $region26: #{tpu_custom_call.1} parent=11 // pred_check_branch
          %176 = sbr.rel (%p174) target = $region28
        $region27: #{tpu_custom_call.1} parent=11 // pred_region
          _
        $region28: #{tpu_custom_call.1} parent=11 // pred_fallthru
          _
      $region12: #{tpu_custom_call.1} parent=5 // pred_fallthru
        _
      %p177 = scmp.lt.s32.totalorder %s14, 2
      // Predicated region
      $region29: #{tpu_custom_call.1} parent=5 // pred_check
        %p178 = pneg %p177
      $region30: #{tpu_custom_call.1} parent=5 // pred_check_branch
        %180 = sbr.rel (%p178) target = $region32
      $region31: #{tpu_custom_call.1} parent=5 // pred_region
        // Predicated region
        $region33: #{tpu_custom_call.1} parent=31 // pred_check
          %p181 = pneg %p34
        $region34: #{tpu_custom_call.1} parent=31 // pred_check_branch
          %183 = sbr.rel (%p181) target = $region36
        $region35: #{tpu_custom_call.1} parent=31 // pred_region
          %p184 = scmp.lt.s32.totalorder %s14, 1
          %s185 = scalar_select %p184, %s14, 1
          %s186 = smul.addr %s185, 8
          %s187 = scalar_lea.vmem %s0, %s186
        $region36: #{tpu_custom_call.1} parent=31 // pred_fallthru
          _
      $region32: #{tpu_custom_call.1} parent=5 // pred_fallthru
        _
      %p188 = scmp.le.s32.totalorder 1, %s14
      %p189 = scmp.lt.s32.totalorder %s14, 3
      %p190 = pnand %p188, %p189
      %p191 = pneg %p190
      // Predicated region
      $region37: #{tpu_custom_call.1} parent=5 // pred_check
        _
      $region38: #{tpu_custom_call.1} parent=5 // pred_check_branch
        %193 = sbr.rel (%p190) target = $region40
      $region39: #{tpu_custom_call.1} parent=5 // pred_region
        %s194 = ssub.s32 %s14, 1
        %p195 = scmp.lt.s32.totalorder %s19, 1
        %s196 = scalar_select %p195, %s19, 1
        %s197 = smul.addr %s196, 8
        %s198 = scalar_lea.vmem %s0, %s197
        %p199 = pneg %p40
        %p200 = pneg %p37
        %p201 = pneg %p61
        %p202 = pneg %p58
        %p203 = pneg %p82
        %p204 = pneg %p79
        %p205 = pneg %p103
        %p206 = pneg %p100
        %p207 = pneg %p124
        %p208 = pneg %p121
        %p209 = pneg %p150
        %p210 = pneg %p147
        %s211 = sand.u32 %s137, 1
        %s212 = scalar_lea.sflag [#allocation3], %s211
        %s213 = sand.u32 %s137, 1
        %s214 = smul.addr %s213, 8
        %s215 = scalar_lea.vmem [#allocation2], %s214
        %p216 = scmp.lt.s32.totalorder %s19, 1
        %s217 = scalar_select %p216, %s19, 1
        %s218 = smul.addr %s217, 8
        %s219 = scalar_lea.vmem %s0, %s218
        %v220 = vld [vmem:[%s219] sm:$0xff]
        %v221 = vld [vmem:[%s1] sm:$0xff]
        %v222 = vld [vmem:[%s1 + $0x8] sm:$0xff]
        %v223 = vld [vmem:[%s1 + $0x10] sm:$0xff]
        %v224 = vld [vmem:[%s1 + $0x18] sm:$0xff]
        %v225 = vld [vmem:[%s1 + $0x20] sm:$0xff]
        %v226 = vld [vmem:[%s1 + $0x28] sm:$0xff]
        %v227 = vld [vmem:[%s1 + $0x30] sm:$0xff]
        %v228 = vld [vmem:[%s1 + $0x38] sm:$0xff]
        %v229 = vld [vmem:[%s1 + $0x40] sm:$0xff]
        %v230 = vld [vmem:[%s1 + $0x48] sm:$0xff]
        %v231 = vld [vmem:[%s1 + $0x50] sm:$0xff]
        %v232 = vld [vmem:[%s1 + $0x58] sm:$0xff]
        %v233 = vld [vmem:[%s1 + $0x60] sm:$0xff]
        %v234 = vld [vmem:[%s1 + $0x68] sm:$0xff]
        %v235 = vld [vmem:[%s1 + $0x70] sm:$0xff]
        %v236 = vld [vmem:[%s1 + $0x78] sm:$0xff]
        %v237 = vld [vmem:[%s2] sm:$0x1]
        %v239 = vlaneseq
        %v240 = vshrl.u32 %v239, 7
        %v241 = vsub.s32 0, %v240
        %v242 = vrot.slane %v237, %v241
        %244 = vmatprep.subr.mxu0 0.0
        %245 = vmatpush1.msra.mxu0 %v221
        %246 = vmatprep.subr.mxu0 0.0
        %247 = vmatpush1.msra.mxu0 %v222
        %248 = vmatprep.subr.mxu0 0.0
        %249 = vmatpush1.msra.mxu0 %v223
        %250 = vmatprep.subr.mxu0 0.0
        %251 = vmatpush1.msra.mxu0 %v224
        %252 = vmatprep.subr.mxu0 0.0
        %253 = vmatpush1.msra.mxu0 %v225
        %254 = vmatprep.subr.mxu0 0.0
        %255 = vmatpush1.msra.mxu0 %v226
        %256 = vmatprep.subr.mxu0 0.0
        %257 = vmatpush1.msra.mxu0 %v227
        %258 = vmatprep.subr.mxu0 0.0
        %259 = vmatpush1.msra.mxu0 %v228
        %260 = vmatprep.subr.mxu0 0.0
        %261 = vmatpush1.msra.mxu0 %v229
        %262 = vmatprep.subr.mxu0 0.0
        %263 = vmatpush1.msra.mxu0 %v230
        %264 = vmatprep.subr.mxu0 0.0
        %265 = vmatpush1.msra.mxu0 %v231
        %266 = vmatprep.subr.mxu0 0.0
        %267 = vmatpush1.msra.mxu0 %v232
        %268 = vmatprep.subr.mxu0 0.0
        %269 = vmatpush1.msra.mxu0 %v233
        %270 = vmatprep.subr.mxu0 0.0
        %271 = vmatpush1.msra.mxu0 %v234
        %272 = vmatprep.subr.mxu0 0.0
        %273 = vmatpush1.msra.mxu0 %v235
        %274 = vmatprep.subr.mxu0 0.0
        %275 = vmatpush1.msra.mxu0 %v236
        %276 = vmatprep.subr.mxu0 0.0
        %277 = vmatpush1.msra.mxu0 0.0
        %278 = vmatprep.subr.mxu0 0.0
        %279 = vmatpush1.msra.mxu0 0.0
        %280 = vmatprep.subr.mxu0 0.0
        %281 = vmatpush1.msra.mxu0 0.0
        %282 = vmatprep.subr.mxu0 0.0
        %283 = vmatpush1.msra.mxu0 0.0
        %284 = vmatprep.subr.mxu0 0.0
        %285 = vmatpush1.msra.mxu0 0.0
        %286 = vmatprep.subr.mxu0 0.0
        %287 = vmatpush1.msra.mxu0 0.0
        %288 = vmatprep.subr.mxu0 0.0
        %289 = vmatpush1.msra.mxu0 0.0
        %290 = vmatprep.subr.mxu0 0.0
        %291 = vmatpush1.msra.mxu0 0.0
        %292 = vmatprep.subr.mxu0 0.0
        %293 = vmatpush1.msra.mxu0 0.0
        %294 = vmatprep.subr.mxu0 0.0
        %295 = vmatpush1.msra.mxu0 0.0
        %296 = vmatprep.subr.mxu0 0.0
        %297 = vmatpush1.msra.mxu0 0.0
        %298 = vmatprep.subr.mxu0 0.0
        %299 = vmatpush1.msra.mxu0 0.0
        %300 = vmatprep.subr.mxu0 0.0
        %301 = vmatpush1.msra.mxu0 0.0
        %302 = vmatprep.subr.mxu0 0.0
        %303 = vmatpush1.msra.mxu0 0.0
        %304 = vmatprep.subr.mxu0 0.0
        %305 = vmatpush1.msra.mxu0 0.0
        %306 = vmatprep.subr.mxu0 0.0
        %307 = vmatpush1.msra.mxu0 0.0
        %308 = vmatprep.mubr.f32.mxu0 0.0
        %309 = vmatmul.mubr.f32.gmra.mrb[0].mxu0 %v220
        %v310 = vpop.f32.mrb[0].mxu0
        %v311 = vadd.f32 %v242, %v310
        %v312 = vpop.f32.mrb[0].mxu0
        %313 = vdwg.mxu0
        %v314 = vmul.f32 %v311, 0.5
        %v315 = vmul.f32 %v311, 0.70710677
        %v316 = verf.f32.pop %v315
        %v317 = vadd.f32 %v316, 1.0
        %v318 = vmul.f32 %v314, %v317
        %v319 = vld [vmem:[%s3] sm:$0xff]
        %v320 = vld [vmem:[%s3 + $0x8] sm:$0xff]
        %v321 = vld [vmem:[%s3 + $0x10] sm:$0xff]
        %v322 = vld [vmem:[%s3 + $0x18] sm:$0xff]
        %v323 = vld [vmem:[%s3 + $0x20] sm:$0xff]
        %v324 = vld [vmem:[%s3 + $0x28] sm:$0xff]
        %v325 = vld [vmem:[%s3 + $0x30] sm:$0xff]
        %v326 = vld [vmem:[%s3 + $0x38] sm:$0xff]
        %v327 = vld [vmem:[%s4] sm:$0x1]
        %v329 = vlaneseq
        %v330 = vshrl.u32 %v329, 7
        %v331 = vsub.s32 0, %v330
        %v332 = vrot.slane %v327, %v331
        %vm334 = vcmask 523264
        %v336 = vsel %vm334, %v318, 0
        %338 = vmatprep.subr.mxu0 0.0
        %339 = vmatpush1.msra.mxu0 %v319
        %340 = vmatprep.subr.mxu0 0.0
        %341 = vmatpush1.msra.mxu0 %v320
        %342 = vmatprep.subr.mxu0 0.0
        %343 = vmatpush1.msra.mxu0 %v321
        %344 = vmatprep.subr.mxu0 0.0
        %345 = vmatpush1.msra.mxu0 %v322
        %346 = vmatprep.subr.mxu0 0.0
        %347 = vmatpush1.msra.mxu0 %v323
        %348 = vmatprep.subr.mxu0 0.0
        %349 = vmatpush1.msra.mxu0 %v324
        %350 = vmatprep.subr.mxu0 0.0
        %351 = vmatpush1.msra.mxu0 %v325
        %352 = vmatprep.subr.mxu0 0.0
        %353 = vmatpush1.msra.mxu0 %v326
        %354 = vmatprep.subr.mxu0 0.0
        %355 = vmatpush1.msra.mxu0 0.0
        %356 = vmatprep.subr.mxu0 0.0
        %357 = vmatpush1.msra.mxu0 0.0
        %358 = vmatprep.subr.mxu0 0.0
        %359 = vmatpush1.msra.mxu0 0.0
        %360 = vmatprep.subr.mxu0 0.0
        %361 = vmatpush1.msra.mxu0 0.0
        %362 = vmatprep.subr.mxu0 0.0
        %363 = vmatpush1.msra.mxu0 0.0
        %364 = vmatprep.subr.mxu0 0.0
        %365 = vmatpush1.msra.mxu0 0.0
        %366 = vmatprep.subr.mxu0 0.0
        %367 = vmatpush1.msra.mxu0 0.0
        %368 = vmatprep.subr.mxu0 0.0
        %369 = vmatpush1.msra.mxu0 0.0
        %370 = vmatprep.subr.mxu0 0.0
        %371 = vmatpush1.msra.mxu0 0.0
        %372 = vmatprep.subr.mxu0 0.0
        %373 = vmatpush1.msra.mxu0 0.0
        %374 = vmatprep.subr.mxu0 0.0
        %375 = vmatpush1.msra.mxu0 0.0
        %376 = vmatprep.subr.mxu0 0.0
        %377 = vmatpush1.msra.mxu0 0.0
        %378 = vmatprep.subr.mxu0 0.0
        %379 = vmatpush1.msra.mxu0 0.0
        %380 = vmatprep.subr.mxu0 0.0
        %381 = vmatpush1.msra.mxu0 0.0
        %382 = vmatprep.subr.mxu0 0.0
        %383 = vmatpush1.msra.mxu0 0.0
        %384 = vmatprep.subr.mxu0 0.0
        %385 = vmatpush1.msra.mxu0 0.0
        %386 = vmatprep.subr.mxu0 0.0
        %387 = vmatpush1.msra.mxu0 0.0
        %388 = vmatprep.subr.mxu0 0.0
        %389 = vmatpush1.msra.mxu0 0.0
        %390 = vmatprep.subr.mxu0 0.0
        %391 = vmatpush1.msra.mxu0 0.0
        %392 = vmatprep.subr.mxu0 0.0
        %393 = vmatpush1.msra.mxu0 0.0
        %394 = vmatprep.subr.mxu0 0.0
        %395 = vmatpush1.msra.mxu0 0.0
        %396 = vmatprep.subr.mxu0 0.0
        %397 = vmatpush1.msra.mxu0 0.0
        %398 = vmatprep.subr.mxu0 0.0
        %399 = vmatpush1.msra.mxu0 0.0
        %400 = vmatprep.subr.mxu0 0.0
        %401 = vmatpush1.msra.mxu0 0.0
        %402 = vmatprep.mubr.f32.mxu0 0.0
        %403 = vmatmul.mubr.f32.gmra.mrb[0].mxu0 %v336
        %v404 = vpop.f32.mrb[0].mxu0
        %v405 = vadd.f32 %v332, %v404
        %v406 = vpop.f32.mrb[0].mxu0
        %407 = vdwg.mxu0
        %408 = vst [vmem:[%s215] sm:$0xff] %v405
        %s409 = sand.u32 %s137, 1
        %s410 = scalar_lea.sflag [#allocation3], %s409
        %s411 = sand.u32 %s137, 1
        %s412 = smul.addr %s411, 8
        %s413 = scalar_lea.vmem [#allocation2], %s412
        // Predicated region
        $region41: #{tpu_custom_call.1} parent=39 // pred_check
          %p414 = pneg %p147
        $region42: #{tpu_custom_call.1} parent=39 // pred_check_branch
          %416 = sbr.rel (%p414) target = $region44
        $region43: #{tpu_custom_call.1} parent=39 // pred_region
          %s418 = ssub.s32 128, 128
          %419 = vsyncadd %s410, %s418
          %s420 = smul.addr %s19, 128
          %s421 = scalar_lea.hbm %s5, %s420
          %s423 = sshll.u32 %s413, 4
          %s424 = int_to_ptr.vmem [resolvable:$true] %s423
          %426 = dma.vmem_to_hbm [thread:$0]  %s424, 128, %s421, %s410
        $region44: #{tpu_custom_call.1} parent=39 // pred_fallthru
          _
      $region40: #{tpu_custom_call.1} parent=5 // pred_fallthru
        _
      %p427 = scmp.le.s32.totalorder 2, %s14
      // Predicated region
      $region45: #{tpu_custom_call.1} parent=5 // pred_check
        %p428 = pneg %p427
      $region46: #{tpu_custom_call.1} parent=5 // pred_check_branch
        %430 = sbr.rel (%p428) target = $region48
      $region47: #{tpu_custom_call.1} parent=5 // pred_region
        %s431 = ssub.s32 %s14, 2
        // Predicated region
        $region49: #{tpu_custom_call.1} parent=47 // pred_check
          %p432 = pneg %p153
        $region50: #{tpu_custom_call.1} parent=47 // pred_check_branch
          %434 = sbr.rel (%p432) target = $region52
        $region51: #{tpu_custom_call.1} parent=47 // pred_region
          %s435 = sand.u32 %s138, 1
          %s436 = scalar_lea.sflag [#allocation3], %s435
          %s437 = sand.u32 %s138, 1
          %s438 = smul.addr %s437, 8
          %s439 = scalar_lea.vmem [#allocation2], %s438
          %440 = dma.done %s436, 128
        $region52: #{tpu_custom_call.1} parent=47 // pred_fallthru
          _
      $region48: #{tpu_custom_call.1} parent=5 // pred_fallthru
        _
    $region6: #{tpu_custom_call.1} parent=1 // loop_footer
      %s18 = sadd.s32 1, %s14
    $region7: #{tpu_custom_call.1} parent=1 // loop_footer_branch
      %13 = sbr.rel target = $region3
    $region8: #{tpu_custom_call.1} parent=1 // loop_exit
      _
    %441 = vsyncpa [#allocation3], 1
    %s442 = scalar_lea.sflag [#allocation3], 1
    %443 = vsyncpa %s442, 1

</llo_original>
